<compile_context>
chip_gen: v5e
topology: v5e:2x2
jax: 0.10.0
libtpu: 0.0.40
codegen_flags: <defaults>
</compile_context>

<pallas_src>
import functools

import numpy as np

import jax
import jax.numpy as jnp
from jax import lax
from jax.experimental import pallas as pl
from jax.experimental.pallas import tpu as pltpu


def _vicreg_pair_kernel(i_tab, j_tab, f_tab,          # scalar prefetch (SMEM)
                        xj_ref, yj_ref,                # (B, td) f32 column tiles
                        out_ref,                       # (1, 8, 128) f32 partials
                        xit_ref, yit_ref,              # (td, B) bf16 scratch
                        *, batch, true_d, tile_d, inner):
    s = pl.program_id(0)
    t = pl.program_id(1)
    p = s * inner + t
    flag = f_tab[p]            # 0: padding, 1: diagonal (row init), 2: off-diag
    inv_b = jnp.float32(1.0 / batch)

    # Center the current column tile (the only tensor input stream).
    xj = xj_ref[...]
    yj = yj_ref[...]
    xcj = xj - jnp.sum(xj, axis=0, keepdims=True) * inv_b
    ycj = yj - jnp.sum(yj, axis=0, keepdims=True) * inv_b
    xcj_b = xcj.astype(jnp.bfloat16)
    ycj_b = ycj.astype(jnp.bfloat16)

    sub = lax.broadcasted_iota(jnp.int32, (1, 8, 128), 1)

    # Diagonal step == first step of every row-group (the j-tile IS the i-tile):
    # refresh the per-row scratch (centered, transposed, bf16) and fully
    # (re)initialize this row's output block, so the block is never read
    # before being written even though its index changes along the trailing
    # "arbitrary" axis.
    @pl.when(flag == 1)
    def _():
        xit_ref[...] = xcj.T.astype(jnp.bfloat16)
        yit_ref[...] = ycj.T.astype(jnp.bfloat16)

        i = i_tab[p]
        # Mask zero-padded features out of the std term only (repr/cov are
        # already exact: padded columns are identically zero).
        col = lax.broadcasted_iota(jnp.int32, (1, tile_d), 1) + i * tile_d
        valid = (col < true_d).astype(jnp.float32)

        d = xj - yj
        repr_p = jnp.sum(d * d)                                  # MSE numerator

        inv_bm1 = jnp.float32(1.0 / (batch - 1))
        vraw_x = jnp.sum(xcj * xcj, axis=0, keepdims=True)       # (1, td) = (B-1)*var
        vraw_y = jnp.sum(ycj * ycj, axis=0, keepdims=True)
        std_x = jnp.sqrt(vraw_x * inv_bm1 + 1e-4)
        std_y = jnp.sqrt(vraw_y * inv_bm1 + 1e-4)
        stdx_p = jnp.sum(jnp.maximum(1.0 - std_x, 0.0) * valid)
        stdy_p = jnp.sum(jnp.maximum(1.0 - std_y, 0.0) * valid)

        # diag(Xc^T Xc) == vraw, so subtract its squares analytically (raw,
        # unscaled units; 1/(B-1)^2 applied once in the wrapper).
        diag_raw = jnp.sum(vraw_x * vraw_x) + jnp.sum(vraw_y * vraw_y)

        out_ref[...] = jnp.where(sub == 0, repr_p,
                       jnp.where(sub == 1, stdx_p,
                       jnp.where(sub == 2, stdy_p,
                       jnp.where(sub == 3, -diag_raw, 0.0))))

    # Covariance contribution: standard (td,B)@(B,td) bf16 matmuls, f32
    # accumulation, x then y sequentially (one (td, td) f32 tile live).
    # Symmetry weight: diag 1, off-diag 2, padding 0  ==  flag itself.
    w = flag.astype(jnp.float32)
    dn = (((1,), (0,)), ((), ()))
    cov_x = lax.dot_general(xit_ref[...], xcj_b, dn,
                            preferred_element_type=jnp.float32)
    contrib = jnp.sum(cov_x * cov_x)
    cov_y = lax.dot_general(yit_ref[...], ycj_b, dn,
                            preferred_element_type=jnp.float32)
    contrib = contrib + jnp.sum(cov_y * cov_y)

    out_ref[...] = out_ref[...] + jnp.where(sub == 3, w * contrib, 0.0)


def _pair_tables(n):
    """Upper-triangular tile pairs, i-major, as (n+1)//2 'super-rows' of fixed
    length n+1 (row i followed by row n-1-i).  Each row-group starts with its
    diagonal pair (flag 1).  Odd-n middle row is padded with weight-0 steps
    that re-point at the last real tile (no extra DMA)."""
    n_super = (n + 1) // 2
    inner = n + 1
    i_tab = np.zeros((n_super, inner), np.int32)
    j_tab = np.zeros((n_super, inner), np.int32)
    f_tab = np.zeros((n_super, inner), np.int32)
    for s in range(n_super):
        rows = (s,) if s == n - 1 - s else (s, n - 1 - s)
        pairs, flags = [], []
        for i in rows:
            for j in range(i, n):
                pairs.append((i, j))
                flags.append(1 if j == i else 2)
        while len(pairs) < inner:
            pairs.append(pairs[-1])
            flags.append(0)
        i_tab[s] = [pr[0] for pr in pairs]
        j_tab[s] = [pr[1] for pr in pairs]
        f_tab[s] = flags
    return i_tab.reshape(-1), j_tab.reshape(-1), f_tab.reshape(-1), n_super, inner


def vicreg_loss(x, y, *, ssl_batch_size, embedding_size,
                sim_coeff, std_coeff, cov_coeff, tile_d=512):
    B, D = x.shape
    assert (B, D) == (ssl_batch_size, embedding_size)
    assert y.shape == x.shape
    assert B >= 2, "unbiased variance needs batch >= 2"

    # Lane-pad the embedding dim to a multiple of 128; losses keep the true
    # B, D divisors so padding is exact.
    d_pad = max(128, ((D + 127) // 128) * 128)
    td = min(max(128, ((tile_d + 127) // 128) * 128), d_pad)
    while d_pad % td:
        td -= 128
    n = d_pad // td

    if d_pad != D:
        x = jnp.pad(x, ((0, 0), (0, d_pad - D)))
        y = jnp.pad(y, ((0, 0), (0, d_pad - D)))
    x = x.astype(jnp.float32)
    y = y.astype(jnp.float32)

    i_tab, j_tab, f_tab, n_super, inner = _pair_tables(n)

    kernel = functools.partial(_vicreg_pair_kernel,
                               batch=B, true_d=D, tile_d=td, inner=inner)

    col_j = pl.BlockSpec((B, td),
                         lambda s, t, it, jt, ft: (0, jt[s * inner + t]))
    out_spec = pl.BlockSpec((1, 8, 128),
                            lambda s, t, it, jt, ft: (it[s * inner + t], 0, 0))

    steps = n_super * inner
    n_pairs = n * (n + 1) // 2
    cost = pl.CostEstimate(
        flops=int(4 * B * td * td * n_pairs + 16 * B * d_pad),
        transcendentals=int(2 * d_pad),
        bytes_accessed=int(2 * steps * B * td * 4 + n * 8 * 128 * 4),
    )

    # Working-set-derived VMEM limit: double-buffered column tiles + bf16
    # transposed scratch + matmul intermediates; never the full v7x 64 MiB.
    vmem_est = 2 * 2 * B * td * 4 + 2 * td * B * 2 + 10 * td * td * 4 + (8 << 20)
    vmem_limit = max(32 << 20, min(112 << 20, int(vmem_est)))

    part = pl.pallas_call(
        kernel,
        grid_spec=pltpu.PrefetchScalarGridSpec(
            num_scalar_prefetch=3,
            grid=(n_super, inner),
            in_specs=[col_j, col_j],
            out_specs=out_spec,
            scratch_shapes=[pltpu.VMEM((td, B), jnp.bfloat16),
                            pltpu.VMEM((td, B), jnp.bfloat16)],
        ),
        out_shape=jax.ShapeDtypeStruct((n, 8, 128), jnp.float32),
        compiler_params=pltpu.CompilerParams(
            dimension_semantics=("parallel", "arbitrary"),
            vmem_limit_bytes=vmem_limit),
        cost_estimate=cost,
    )(jnp.asarray(i_tab), jnp.asarray(j_tab), jnp.asarray(f_tab), x, y)

    # O(n) partial reduction + coefficient combine (trivial scalar math).
    inv_bm1 = 1.0 / (B - 1)
    repr_loss = jnp.sum(part[:, 0, 0]) / jnp.float32(B * D)
    std_loss = (jnp.sum(part[:, 1, 0]) + jnp.sum(part[:, 2, 0])) / jnp.float32(2 * D)
    cov_loss = jnp.sum(part[:, 3, 0]) * jnp.float32(inv_bm1 * inv_bm1) / jnp.float32(D)
    vic_loss = (jnp.float32(sim_coeff) * repr_loss +
                jnp.float32(std_coeff) * std_loss +
                jnp.float32(cov_coeff) * cov_loss)
    return repr_loss, std_loss, cov_loss, vic_loss


def _reference(x, y, B, D, sim_c, std_c, cov_c):
    """Pure-JAX reference mirroring the PyTorch forward."""
    repr_loss = jnp.mean((x - y) ** 2)
    xc = x - x.mean(axis=0)
    yc = y - y.mean(axis=0)
    std_x = jnp.sqrt(xc.var(axis=0, ddof=1) + 1e-4)
    std_y = jnp.sqrt(yc.var(axis=0, ddof=1) + 1e-4)
    std_loss = (jnp.mean(jax.nn.relu(1 - std_x)) / 2 +
                jnp.mean(jax.nn.relu(1 - std_y)) / 2)
    cov_x = jnp.matmul(xc.T, xc, precision=lax.Precision.HIGHEST) / (B - 1)
    cov_y = jnp.matmul(yc.T, yc, precision=lax.Precision.HIGHEST) / (B - 1)
    off = lambda m: m - jnp.diag(jnp.diag(m))
    cov_loss = jnp.sum(off(cov_x) ** 2) / D + jnp.sum(off(cov_y) ** 2) / D
    vic = sim_c * repr_loss + std_c * std_loss + cov_c * cov_loss
    return repr_loss, std_loss, cov_loss, vic


if __name__ == "__main__":
    sim_coeff, std_coeff, cov_coeff = 25.0, 25.0, 1.0
    key = jax.random.PRNGKey(0)

    # Case 1: B=8,  D=32,  td->128: single tile, lane padding, n=1 grid.
    # Case 2: B=16, D=200, td=128:  padded D=256, n=2 (one super-row, no pad).
    # Case 3: B=32, D=300, td=128:  padded D=384, n=3 (two super-rows, one
    #         padded/weight-0 step) -> exercises the "parallel" outer axis.
    for (B, D, td) in ((8, 32, 512), (16, 200, 128), (32, 300, 128)):
        key, kx, ky = jax.random.split(key, 3)
        x = jax.random.normal(kx, (B, D), dtype=jnp.float32)
        y = jax.random.normal(ky, (B, D), dtype=jnp.float32)

        out = vicreg_loss(x, y, ssl_batch_size=B, embedding_size=D,
                          sim_coeff=sim_coeff, std_coeff=std_coeff,
                          cov_coeff=cov_coeff, tile_d=td)
        out = jax.block_until_ready(out)

        ref = _reference(x, y, B, D, sim_coeff, std_coeff, cov_coeff)
        # bf16 MXU operands add ~1e-4 relative error to cov_loss only.
        for got, want in zip(out, ref):
            assert jnp.allclose(got, want, rtol=3e-3, atol=1e-3), (B, D, got, want)

    print("KERNEL_OK")
</pallas_src>

<mosaic_0001>
module attributes {stable_mosaic.version = 11 : i64} {
  func.func @_vicreg_pair_kernel(%arg0: i32, %arg1: i32, %arg2: memref<2xi32, #tpu.memory_space<smem>>, %arg3: memref<2xi32, #tpu.memory_space<smem>>, %arg4: memref<2xi32, #tpu.memory_space<smem>>, %arg5: memref<8x128xf32, #tpu.memory_space<vmem>>, %arg6: memref<8x128xf32, #tpu.memory_space<vmem>>, %arg7: memref<1x8x128xf32, #tpu.memory_space<vmem>>, %arg8: memref<128x8xbf16, #tpu.memory_space<vmem>>, %arg9: memref<128x8xbf16, #tpu.memory_space<vmem>>) attributes {dimension_semantics = [#tpu.dimension_semantics<parallel>, #tpu.dimension_semantics<arbitrary>], iteration_bounds = array<i64: 1, 2>, scalar_prefetch = 3 : i64, scratch_operands = 2 : i64, tpu.core_type = #tpu.core_type<tc>, window_params = [{transform_indices = @transform_0, window_bounds = array<i64: 8, 128>}, {transform_indices = @transform_1, window_bounds = array<i64: 8, 128>}, {transform_indices = @transform_2, window_bounds = array<i64: 1, 8, 128>}]} {
    %c2_i32 = arith.constant 2 : i32
    %0 = arith.muli %arg0, %c2_i32 : i32
    %1 = arith.addi %0, %arg1 : i32
    %2 = arith.index_cast %1 : i32 to index
    %3 = memref.load %arg4[%2] : memref<2xi32, #tpu.memory_space<smem>>
    %c0 = arith.constant 0 : index
    %c0_0 = arith.constant 0 : index
    %4 = vector.load %arg5[%c0, %c0_0] : memref<8x128xf32, #tpu.memory_space<vmem>>, vector<8x128xf32>
    %c0_1 = arith.constant 0 : index
    %c0_2 = arith.constant 0 : index
    %5 = vector.load %arg6[%c0_1, %c0_2] : memref<8x128xf32, #tpu.memory_space<vmem>>, vector<8x128xf32>
    %cst = arith.constant dense<0.000000e+00> : vector<128xf32>
    %6 = vector.multi_reduction <add>, %4, %cst [0] : vector<8x128xf32> to vector<128xf32>
    %7 = vector.shape_cast %6 : vector<128xf32> to vector<1x128xf32>
    %cst_3 = arith.constant 1.250000e-01 : f32
    %8 = vector.broadcast %cst_3 : f32 to vector<1x128xf32>
    %9 = arith.mulf %7, %8 : vector<1x128xf32>
    %10 = vector.broadcast %9 : vector<1x128xf32> to vector<8x128xf32>
    %11 = arith.subf %4, %10 : vector<8x128xf32>
    %cst_4 = arith.constant dense<0.000000e+00> : vector<128xf32>
    %12 = vector.multi_reduction <add>, %5, %cst_4 [0] : vector<8x128xf32> to vector<128xf32>
    %13 = vector.shape_cast %12 : vector<128xf32> to vector<1x128xf32>
    %cst_5 = arith.constant 1.250000e-01 : f32
    %14 = vector.broadcast %cst_5 : f32 to vector<1x128xf32>
    %15 = arith.mulf %13, %14 : vector<1x128xf32>
    %16 = vector.broadcast %15 : vector<1x128xf32> to vector<8x128xf32>
    %17 = arith.subf %5, %16 : vector<8x128xf32>
    %18 = arith.truncf %11 : vector<8x128xf32> to vector<8x128xbf16>
    %19 = arith.truncf %17 : vector<8x128xf32> to vector<8x128xbf16>
    %20 = tpu.iota {dimensions = array<i32: 1>} : vector<1x8x128xi32>
    %c1_i32 = arith.constant 1 : i32
    %21 = arith.cmpi eq, %3, %c1_i32 : i32
    %22 = arith.extui %21 : i1 to i32
    %c0_i32 = arith.constant 0 : i32
    %23 = arith.cmpi ne, %22, %c0_i32 : i32
    scf.if %23 {
      %49 = tpu.transpose %11, [1, 0] : vector<8x128xf32> -> vector<128x8xf32>
      %50 = arith.truncf %49 : vector<128x8xf32> to vector<128x8xbf16>
      %c0_21 = arith.constant 0 : index
      %c0_22 = arith.constant 0 : index
      %51 = vector.load %arg8[%c0_21, %c0_22] : memref<128x8xbf16, #tpu.memory_space<vmem>>, vector<128x8xbf16>
      tpu.vector_store %arg8[%c0_21, %c0_22], %50 {strides = array<i32>} : memref<128x8xbf16, #tpu.memory_space<vmem>>, vector<128x8xbf16>,
      %52 = tpu.transpose %17, [1, 0] : vector<8x128xf32> -> vector<128x8xf32>
      %53 = arith.truncf %52 : vector<128x8xf32> to vector<128x8xbf16>
      %c0_23 = arith.constant 0 : index
      %c0_24 = arith.constant 0 : index
      %54 = vector.load %arg9[%c0_23, %c0_24] : memref<128x8xbf16, #tpu.memory_space<vmem>>, vector<128x8xbf16>
      tpu.vector_store %arg9[%c0_23, %c0_24], %53 {strides = array<i32>} : memref<128x8xbf16, #tpu.memory_space<vmem>>, vector<128x8xbf16>,
      %55 = arith.index_cast %1 : i32 to index
      %56 = memref.load %arg2[%55] : memref<2xi32, #tpu.memory_space<smem>>
      %57 = tpu.iota {dimensions = array<i32: 1>} : vector<1x128xi32>
      %c128_i32 = arith.constant 128 : i32
      %58 = arith.muli %56, %c128_i32 : i32
      %59 = vector.broadcast %58 : i32 to vector<1x128xi32>
      %60 = arith.addi %57, %59 : vector<1x128xi32>
      %c32_i32 = arith.constant 32 : i32
      %61 = vector.broadcast %c32_i32 : i32 to vector<1x128xi32>
      %62 = arith.cmpi slt, %60, %61 : vector<1x128xi32>
      %63 = arith.extui %62 : vector<1x128xi1> to vector<1x128xi32>
      %64 = arith.sitofp %63 : vector<1x128xi32> to vector<1x128xf32>
      %65 = arith.subf %4, %5 : vector<8x128xf32>
      %66 = arith.mulf %65, %65 : vector<8x128xf32>
      %67 = vector.shape_cast %66 : vector<8x128xf32> to vector<1x8x128xf32>
      %cst_25 = arith.constant dense<0.000000e+00> : vector<1xf32>
      %68 = vector.multi_reduction <add>, %67, %cst_25 [1, 2] : vector<1x8x128xf32> to vector<1xf32>
      %69 = vector.shape_cast %68 : vector<1xf32> to vector<1x1x1xf32>
      %70 = vector.extract %69[0, 0, 0] : f32 from vector<1x1x1xf32>
      %71 = arith.mulf %11, %11 : vector<8x128xf32>
      %cst_26 = arith.constant dense<0.000000e+00> : vector<128xf32>
      %72 = vector.multi_reduction <add>, %71, %cst_26 [0] : vector<8x128xf32> to vector<128xf32>
      %73 = vector.shape_cast %72 : vector<128xf32> to vector<1x128xf32>
      %74 = arith.mulf %17, %17 : vector<8x128xf32>
      %cst_27 = arith.constant dense<0.000000e+00> : vector<128xf32>
      %75 = vector.multi_reduction <add>, %74, %cst_27 [0] : vector<8x128xf32> to vector<128xf32>
      %76 = vector.shape_cast %75 : vector<128xf32> to vector<1x128xf32>
      %cst_28 = arith.constant 0.142857149 : f32
      %77 = vector.broadcast %cst_28 : f32 to vector<1x128xf32>
      %78 = arith.mulf %73, %77 : vector<1x128xf32>
      %cst_29 = arith.constant 9.99999974E-5 : f32
      %79 = vector.broadcast %cst_29 : f32 to vector<1x128xf32>
      %80 = arith.addf %78, %79 : vector<1x128xf32>
      %81 = math.sqrt %80 : vector<1x128xf32>
      %cst_30 = arith.constant 0.142857149 : f32
      %82 = vector.broadcast %cst_30 : f32 to vector<1x128xf32>
      %83 = arith.mulf %76, %82 : vector<1x128xf32>
      %cst_31 = arith.constant 9.99999974E-5 : f32
      %84 = vector.broadcast %cst_31 : f32 to vector<1x128xf32>
      %85 = arith.addf %83, %84 : vector<1x128xf32>
      %86 = math.sqrt %85 : vector<1x128xf32>
      %cst_32 = arith.constant 1.000000e+00 : f32
      %87 = vector.broadcast %cst_32 : f32 to vector<1x128xf32>
      %88 = arith.subf %87, %81 : vector<1x128xf32>
      %cst_33 = arith.constant 0.000000e+00 : f32
      %89 = vector.broadcast %cst_33 : f32 to vector<1x128xf32>
      %90 = arith.maximumf %88, %89 : vector<1x128xf32>
      %91 = arith.mulf %90, %64 : vector<1x128xf32>
      %92 = vector.shape_cast %91 : vector<1x128xf32> to vector<1x1x128xf32>
      %cst_34 = arith.constant dense<0.000000e+00> : vector<1xf32>
      %93 = vector.multi_reduction <add>, %92, %cst_34 [1, 2] : vector<1x1x128xf32> to vector<1xf32>
      %94 = vector.shape_cast %93 : vector<1xf32> to vector<1x1x1xf32>
      %95 = vector.extract %94[0, 0, 0] : f32 from vector<1x1x1xf32>
      %cst_35 = arith.constant 1.000000e+00 : f32
      %96 = vector.broadcast %cst_35 : f32 to vector<1x128xf32>
      %97 = arith.subf %96, %86 : vector<1x128xf32>
      %cst_36 = arith.constant 0.000000e+00 : f32
      %98 = vector.broadcast %cst_36 : f32 to vector<1x128xf32>
      %99 = arith.maximumf %97, %98 : vector<1x128xf32>
      %100 = arith.mulf %99, %64 : vector<1x128xf32>
      %101 = vector.shape_cast %100 : vector<1x128xf32> to vector<1x1x128xf32>
      %cst_37 = arith.constant dense<0.000000e+00> : vector<1xf32>
      %102 = vector.multi_reduction <add>, %101, %cst_37 [1, 2] : vector<1x1x128xf32> to vector<1xf32>
      %103 = vector.shape_cast %102 : vector<1xf32> to vector<1x1x1xf32>
      %104 = vector.extract %103[0, 0, 0] : f32 from vector<1x1x1xf32>
      %105 = arith.mulf %73, %73 : vector<1x128xf32>
      %106 = vector.shape_cast %105 : vector<1x128xf32> to vector<1x1x128xf32>
      %cst_38 = arith.constant dense<0.000000e+00> : vector<1xf32>
      %107 = vector.multi_reduction <add>, %106, %cst_38 [1, 2] : vector<1x1x128xf32> to vector<1xf32>
      %108 = vector.shape_cast %107 : vector<1xf32> to vector<1x1x1xf32>
      %109 = vector.extract %108[0, 0, 0] : f32 from vector<1x1x1xf32>
      %110 = arith.mulf %76, %76 : vector<1x128xf32>
      %111 = vector.shape_cast %110 : vector<1x128xf32> to vector<1x1x128xf32>
      %cst_39 = arith.constant dense<0.000000e+00> : vector<1xf32>
      %112 = vector.multi_reduction <add>, %111, %cst_39 [1, 2] : vector<1x1x128xf32> to vector<1xf32>
      %113 = vector.shape_cast %112 : vector<1xf32> to vector<1x1x1xf32>
      %114 = vector.extract %113[0, 0, 0] : f32 from vector<1x1x1xf32>
      %115 = arith.addf %109, %114 : f32
      %c0_i32_40 = arith.constant 0 : i32
      %116 = vector.broadcast %c0_i32_40 : i32 to vector<1x8x128xi32>
      %117 = arith.cmpi eq, %20, %116 : vector<1x8x128xi32>
      %c1_i32_41 = arith.constant 1 : i32
      %118 = vector.broadcast %c1_i32_41 : i32 to vector<1x8x128xi32>
      %119 = arith.cmpi eq, %20, %118 : vector<1x8x128xi32>
      %c2_i32_42 = arith.constant 2 : i32
      %120 = vector.broadcast %c2_i32_42 : i32 to vector<1x8x128xi32>
      %121 = arith.cmpi eq, %20, %120 : vector<1x8x128xi32>
      %c3_i32_43 = arith.constant 3 : i32
      %122 = vector.broadcast %c3_i32_43 : i32 to vector<1x8x128xi32>
      %123 = arith.cmpi eq, %20, %122 : vector<1x8x128xi32>
      %cst_44 = arith.constant 0.000000e+00 : f32
      %124 = arith.subf %cst_44, %115 : f32
      %cst_45 = arith.constant 0.000000e+00 : f32
      %125 = vector.broadcast %124 : f32 to vector<1x8x128xf32>
      %126 = vector.broadcast %cst_45 : f32 to vector<1x8x128xf32>
      %127 = arith.select %123, %125, %126 : vector<1x8x128xi1>, vector<1x8x128xf32>
      %128 = vector.broadcast %104 : f32 to vector<1x8x128xf32>
      %129 = arith.select %121, %128, %127 : vector<1x8x128xi1>, vector<1x8x128xf32>
      %130 = vector.broadcast %95 : f32 to vector<1x8x128xf32>
      %131 = arith.select %119, %130, %129 : vector<1x8x128xi1>, vector<1x8x128xf32>
      %132 = vector.broadcast %70 : f32 to vector<1x8x128xf32>
      %133 = arith.select %117, %132, %131 : vector<1x8x128xi1>, vector<1x8x128xf32>
      %c0_46 = arith.constant 0 : index
      %c0_47 = arith.constant 0 : index
      %c0_48 = arith.constant 0 : index
      %134 = vector.load %arg7[%c0_46, %c0_47, %c0_48] : memref<1x8x128xf32, #tpu.memory_space<vmem>>, vector<1x8x128xf32>
      tpu.vector_store %arg7[%c0_46, %c0_47, %c0_48], %133 {strides = array<i32>} : memref<1x8x128xf32, #tpu.memory_space<vmem>>, vector<1x8x128xf32>,
    } else {
    }
    %24 = arith.sitofp %3 : i32 to f32
    %c0_6 = arith.constant 0 : index
    %c0_7 = arith.constant 0 : index
    %25 = vector.load %arg8[%c0_6, %c0_7] : memref<128x8xbf16, #tpu.memory_space<vmem>>, vector<128x8xbf16>
    %cst_8 = arith.constant dense<0.000000e+00> : vector<128x128xf32>
    %26 = tpu.matmul %25, %18, %cst_8 {dimension_numbers = #tpu.dot_dimension_numbers<[1], [0], [0], [1], [0, 0, 1, 1], [], []>} : vector<128x8xbf16>, vector<8x128xbf16>, vector<128x128xf32> -> vector<128x128xf32>
    %27 = arith.mulf %26, %26 : vector<128x128xf32>
    %28 = vector.shape_cast %27 : vector<128x128xf32> to vector<1x128x128xf32>
    %cst_9 = arith.constant dense<0.000000e+00> : vector<1xf32>
    %29 = vector.multi_reduction <add>, %28, %cst_9 [1, 2] : vector<1x128x128xf32> to vector<1xf32>
    %30 = vector.shape_cast %29 : vector<1xf32> to vector<1x1x1xf32>
    %31 = vector.extract %30[0, 0, 0] : f32 from vector<1x1x1xf32>
    %c0_10 = arith.constant 0 : index
    %c0_11 = arith.constant 0 : index
    %32 = vector.load %arg9[%c0_10, %c0_11] : memref<128x8xbf16, #tpu.memory_space<vmem>>, vector<128x8xbf16>
    %cst_12 = arith.constant dense<0.000000e+00> : vector<128x128xf32>
    %33 = tpu.matmul %32, %19, %cst_12 {dimension_numbers = #tpu.dot_dimension_numbers<[1], [0], [0], [1], [0, 0, 1, 1], [], []>} : vector<128x8xbf16>, vector<8x128xbf16>, vector<128x128xf32> -> vector<128x128xf32>
    %34 = arith.mulf %33, %33 : vector<128x128xf32>
    %35 = vector.shape_cast %34 : vector<128x128xf32> to vector<1x128x128xf32>
    %cst_13 = arith.constant dense<0.000000e+00> : vector<1xf32>
    %36 = vector.multi_reduction <add>, %35, %cst_13 [1, 2] : vector<1x128x128xf32> to vector<1xf32>
    %37 = vector.shape_cast %36 : vector<1xf32> to vector<1x1x1xf32>
    %38 = vector.extract %37[0, 0, 0] : f32 from vector<1x1x1xf32>
    %39 = arith.addf %31, %38 : f32
    %c0_14 = arith.constant 0 : index
    %c0_15 = arith.constant 0 : index
    %c0_16 = arith.constant 0 : index
    %40 = vector.load %arg7[%c0_14, %c0_15, %c0_16] : memref<1x8x128xf32, #tpu.memory_space<vmem>>, vector<1x8x128xf32>
    %c3_i32 = arith.constant 3 : i32
    %41 = vector.broadcast %c3_i32 : i32 to vector<1x8x128xi32>
    %42 = arith.cmpi eq, %20, %41 : vector<1x8x128xi32>
    %43 = arith.mulf %24, %39 : f32
    %cst_17 = arith.constant 0.000000e+00 : f32
    %44 = vector.broadcast %43 : f32 to vector<1x8x128xf32>
    %45 = vector.broadcast %cst_17 : f32 to vector<1x8x128xf32>
    %46 = arith.select %42, %44, %45 : vector<1x8x128xi1>, vector<1x8x128xf32>
    %47 = arith.addf %40, %46 : vector<1x8x128xf32>
    %c0_18 = arith.constant 0 : index
    %c0_19 = arith.constant 0 : index
    %c0_20 = arith.constant 0 : index
    %48 = vector.load %arg7[%c0_18, %c0_19, %c0_20] : memref<1x8x128xf32, #tpu.memory_space<vmem>>, vector<1x8x128xf32>
    tpu.vector_store %arg7[%c0_18, %c0_19, %c0_20], %47 {strides = array<i32>} : memref<1x8x128xf32, #tpu.memory_space<vmem>>, vector<1x8x128xf32>,
    return
  }
  func.func @transform_0(%arg0: i32, %arg1: i32, %arg2: memref<2xi32, #tpu.memory_space<smem>>, %arg3: memref<2xi32, #tpu.memory_space<smem>>, %arg4: memref<2xi32, #tpu.memory_space<smem>>) -> (i32, i32) {
    %c2_i32 = arith.constant 2 : i32
    %0 = arith.muli %arg0, %c2_i32 : i32
    %1 = arith.addi %0, %arg1 : i32
    %2 = arith.index_cast %1 : i32 to index
    %3 = memref.load %arg3[%2] : memref<2xi32, #tpu.memory_space<smem>>
    %c0_i32 = arith.constant 0 : i32
    %c0_i32_0 = arith.constant 0 : i32
    return %c0_i32, %3 : i32, i32
  }
  func.func @transform_1(%arg0: i32, %arg1: i32, %arg2: memref<2xi32, #tpu.memory_space<smem>>, %arg3: memref<2xi32, #tpu.memory_space<smem>>, %arg4: memref<2xi32, #tpu.memory_space<smem>>) -> (i32, i32) {
    %c2_i32 = arith.constant 2 : i32
    %0 = arith.muli %arg0, %c2_i32 : i32
    %1 = arith.addi %0, %arg1 : i32
    %2 = arith.index_cast %1 : i32 to index
    %3 = memref.load %arg3[%2] : memref<2xi32, #tpu.memory_space<smem>>
    %c0_i32 = arith.constant 0 : i32
    %c0_i32_0 = arith.constant 0 : i32
    return %c0_i32, %3 : i32, i32
  }
  func.func @transform_2(%arg0: i32, %arg1: i32, %arg2: memref<2xi32, #tpu.memory_space<smem>>, %arg3: memref<2xi32, #tpu.memory_space<smem>>, %arg4: memref<2xi32, #tpu.memory_space<smem>>) -> (i32, i32, i32) {
    %c2_i32 = arith.constant 2 : i32
    %0 = arith.muli %arg0, %c2_i32 : i32
    %1 = arith.addi %0, %arg1 : i32
    %2 = arith.index_cast %1 : i32 to index
    %3 = memref.load %arg2[%2] : memref<2xi32, #tpu.memory_space<smem>>
    %c0_i32 = arith.constant 0 : i32
    %c0_i32_0 = arith.constant 0 : i32
    %c0_i32_1 = arith.constant 0 : i32
    return %3, %c0_i32, %c0_i32_0 : i32, i32, i32
  }
}

</mosaic_0001>

<llo_original>
// kernel: tpu_custom_call.1
$region0: #{tpu_custom_call.1}
  #allocation0 [shape = 'u32[]', space=smem, size = 0x4, offset = 0x4, fixed_abs, tag = 'smem constant byte address 0x4 - core index']
  #allocation1 [shape = 'u32[72,128]{1,0:T(1,128)}', space=vmem, size = 0x9000, scoped, tag = 'internal scratch']
  #allocation2 [shape = 'bf16[128,8]{1,0:T(8,128)(2,1)}', space=vmem, size = 0x8000, scoped, tag = 'scratch operand']
  #allocation3 [shape = 'bf16[128,8]{1,0:T(8,128)(2,1)}', space=vmem, size = 0x8000, scoped, tag = 'scratch operand']
  #allocation4 [shape = 's32[1]{0}', space=sflag, size = 0x4, scoped, tag = 'scoped memory for tpu_custom_call.1']
  #allocation5 [shape = 'u8[512]{0}', space=smem, size = 0x200, scoped, tag = 'prefetched SMEM operand 0']
  #allocation6 [shape = 'u8[512]{0}', space=smem, size = 0x200, scoped, tag = 'prefetched SMEM operand 1']
  #allocation7 [shape = 'u8[512]{0}', space=smem, size = 0x200, scoped, tag = 'prefetched SMEM operand 2']
  %s0 = inlined_call_operand.hbm [shape: s32[2], index: 0, kind: input, shape index: {}]
  %s1 = inlined_call_operand.hbm [shape: s32[2], index: 1, kind: input, shape index: {}]
  %s2 = inlined_call_operand.vmem [shape: s32[2], index: 2, kind: input, shape index: {}]
  %s3 = inlined_call_operand.hbm [shape: f32[8,128], index: 3, kind: input, shape index: {}]
  %s4 = inlined_call_operand.hbm [shape: f32[8,128], index: 4, kind: input, shape index: {}]
  %s5 = inlined_call_operand.hbm [shape: f32[1,8,128], index: 5, kind: output, shape index: {}]
  %s6 = sld [smem:[#allocation0]]
  $region53: #{tpu_custom_call.1} parent=0
    _
  %s8 = ssub.s32 1, %s6
  %s9 = scalar_select 0, %s8, %s6
  %s11 = sshll.u32 %s0, 4
  %s12 = int_to_ptr.hbm [resolvable:$true] %s11
  %14 = dma.hbm_to_smem %s12, 16, [#allocation5], [#allocation4]
  %s16 = sshll.u32 %s1, 4
  %s17 = int_to_ptr.hbm [resolvable:$true] %s16
  %19 = dma.hbm_to_smem %s17, 16, [#allocation6], [#allocation4]
  %s21 = sshll.u32 %s2, 4
  %s22 = int_to_ptr.vmem [resolvable:$true] %s21
  %24 = dma.vmem_to_smem %s22, 16, [#allocation7], [#allocation4]
  %26 = dma.done [#allocation4], 48
  %27 = sfence
  $region1: #{tpu_custom_call.1} parent=0
    #allocation8 [shape = 'u8[8192]{0}', space=vmem, size = 0x2000, scoped, tag = 'input window, operand 3']
    #allocation9 [shape = 's32[2]{0}', space=sflag, size = 0x8, scoped, tag = 'scoped memory for tpu_custom_call.1']
    #allocation10 [shape = 's32[2]{0}', space=sflag, size = 0x8, scoped, tag = 'scoped memory for tpu_custom_call.1']
    #allocation11 [shape = 'u8[8192]{0}', space=vmem, size = 0x2000, scoped, tag = 'input window, operand 4']
    #allocation12 [shape = 's32[2]{0}', space=sflag, size = 0x8, scoped, tag = 'scoped memory for tpu_custom_call.1']
    #allocation13 [shape = 'u8[8192]{0}', space=vmem, size = 0x2000, scoped, tag = 'output window, operand 0']
    %28 = vsyncpa [#allocation9], 0
    %s29 = scalar_lea.sflag [#allocation9], 1
    %30 = vsyncpa %s29, 0
    %31 = vsyncpa [#allocation12], 0
    %s32 = scalar_lea.sflag [#allocation12], 1
    %33 = vsyncpa %s32, 0
    %34 = vsyncpa [#allocation10], 0
    %s35 = scalar_lea.sflag [#allocation10], 1
    %36 = vsyncpa %s35, 0
    loop: start=0, step=1, limit=4
    $region2: #{tpu_custom_call.1} parent=1 // loop_pre_header
      _
    $region3: #{tpu_custom_call.1} parent=1 // loop_header
      %s38 = sphi 0, %s42
      %p39 = scmp.ge.s32.totalorder %s38, 4
      %s45 = sphi 0, %s57
      %s46 = sphi 0, %s53
      %s47 = sphi 0, %s45
      %s48 = sphi 0, %s46
      %s49 = sphi 0, %s47
      %s50 = sphi 0, %s48
      %s66 = sphi 0, %s68
      %s69 = sphi 0, %s66
      %s70 = sphi 0, %s69
      %s86 = sphi 0, %s70
      %s98 = sphi 0, %s100
      %s101 = sphi 0, %s98
      %s102 = sphi 0, %s101
      %s118 = sphi 0, %s102
      %s130 = sphi 0, %s132
      %s133 = sphi 0, %s130
      %s134 = sphi 0, %s133
      %s150 = sphi 0, %s134
    $region4: #{tpu_custom_call.1} parent=1 // loop_header_branch
      %41 = sbr.rel (%p39) target = $region8
    $region5: #{tpu_custom_call.1} parent=1 // loop_body
      %s43 = ssub.s32 %s38, 1
      %s44 = ssub.s32 %s38, 2
      %s51 = sadd.s32 1, %s46
      %p52 = scmp.ge.s32.totalorder %s51, 2
      %s53 = scalar_select %p52, 0, %s51
      %s54 = sadd.s32 1, %s45
      %s55 = scalar_select %p52, %s54, %s45
      %p56 = scmp.ge.s32.totalorder %s55, 1
      %s57 = scalar_select %p56, 0, %s55
      %s58 = smul.u32 %s45, 2
      %s59 = sadd.s32 %s58, %s46
      %s60 = sld [smem:[#allocation6 + %s59]]
      %s61 = smul.u32 %s57, 2
      %s62 = sadd.s32 %s61, %s53
      %s63 = sld [smem:[#allocation6 + %s62]]
      %s64 = ssub.s32 %s60, %s63
      %p65 = scmp.eq.s32.totalorder %s64, 0
      %s67 = sadd.s32 %s66, 1
      %s68 = scalar_select %p65, %s66, %s67
      %p71 = pneg %p65
      %p72 = scmp.eq.s32.totalorder %s38, 1
      %p73 = por %p71, %p72
      %p74 = scmp.ne.s32.totalorder %s66, %s69
      %p75 = scmp.eq.s32.totalorder %s38, 0
      %p76 = por %p74, %p75
      %p77 = scmp.ne.s32.totalorder %s66, %s69
      %p78 = scmp.eq.s32.totalorder %s43, 1
      %p79 = por %p77, %p78
      %p80 = scmp.ne.s32.totalorder %s69, %s70
      %p81 = scmp.eq.s32.totalorder %s43, 0
      %p82 = por %p80, %p81
      %p83 = scmp.ne.s32.totalorder %s69, %s70
      %p84 = scmp.eq.s32.totalorder %s44, 1
      %p85 = por %p83, %p84
      %p87 = scmp.ne.s32.totalorder %s70, %s86
      %p88 = scmp.eq.s32.totalorder %s44, 0
      %p89 = por %p87, %p88
      %s90 = smul.u32 %s45, 2
      %s91 = sadd.s32 %s90, %s46
      %s92 = sld [smem:[#allocation6 + %s91]]
      %s93 = smul.u32 %s57, 2
      %s94 = sadd.s32 %s93, %s53
      %s95 = sld [smem:[#allocation6 + %s94]]
      %s96 = ssub.s32 %s92, %s95
      %p97 = scmp.eq.s32.totalorder %s96, 0
      %s99 = sadd.s32 %s98, 1
      %s100 = scalar_select %p97, %s98, %s99
      %p103 = pneg %p97
      %p104 = scmp.eq.s32.totalorder %s38, 1
      %p105 = por %p103, %p104
      %p106 = scmp.ne.s32.totalorder %s98, %s101
      %p107 = scmp.eq.s32.totalorder %s38, 0
      %p108 = por %p106, %p107
      %p109 = scmp.ne.s32.totalorder %s98, %s101
      %p110 = scmp.eq.s32.totalorder %s43, 1
      %p111 = por %p109, %p110
      %p112 = scmp.ne.s32.totalorder %s101, %s102
      %p113 = scmp.eq.s32.totalorder %s43, 0
      %p114 = por %p112, %p113
      %p115 = scmp.ne.s32.totalorder %s101, %s102
      %p116 = scmp.eq.s32.totalorder %s44, 1
      %p117 = por %p115, %p116
      %p119 = scmp.ne.s32.totalorder %s102, %s118
      %p120 = scmp.eq.s32.totalorder %s44, 0
      %p121 = por %p119, %p120
      %s122 = smul.u32 %s45, 2
      %s123 = sadd.s32 %s122, %s46
      %s124 = sld [smem:[#allocation5 + %s123]]
      %s125 = smul.u32 %s57, 2
      %s126 = sadd.s32 %s125, %s53
      %s127 = sld [smem:[#allocation5 + %s126]]
      %s128 = ssub.s32 %s124, %s127
      %p129 = scmp.eq.s32.totalorder %s128, 0
      %s131 = sadd.s32 %s130, 1
      %s132 = scalar_select %p129, %s130, %s131
      %p135 = pneg %p129
      %p136 = scmp.eq.s32.totalorder %s38, 1
      %p137 = por %p135, %p136
      %p138 = scmp.ne.s32.totalorder %s130, %s133
      %p139 = scmp.eq.s32.totalorder %s38, 0
      %p140 = por %p138, %p139
      %p141 = scmp.ne.s32.totalorder %s130, %s133
      %p142 = scmp.eq.s32.totalorder %s43, 1
      %p143 = por %p141, %p142
      %p144 = scmp.ne.s32.totalorder %s133, %s134
      %p145 = scmp.eq.s32.totalorder %s43, 0
      %p146 = por %p144, %p145
      %p147 = scmp.ne.s32.totalorder %s133, %s134
      %p148 = scmp.eq.s32.totalorder %s44, 1
      %p149 = por %p147, %p148
      %p151 = scmp.ne.s32.totalorder %s134, %s150
      %p152 = scmp.eq.s32.totalorder %s44, 0
      %p153 = por %p151, %p152
      %p154 = scmp.le.s32.totalorder 1, %s38
      %p155 = scmp.lt.s32.totalorder %s38, 3
      %p156 = pnand %p154, %p155
      %p157 = pneg %p156
      // Predicated region
      $region9: #{tpu_custom_call.1} parent=5 // pred_check
        _
      $region10: #{tpu_custom_call.1} parent=5 // pred_check_branch
        %159 = sbr.rel (%p156) target = $region12
      $region11: #{tpu_custom_call.1} parent=5 // pred_region
        %s160 = ssub.s32 %s38, 1
      $region12: #{tpu_custom_call.1} parent=5 // pred_fallthru
        _
      %p161 = scmp.lt.s32.totalorder %s38, 2
      // Predicated region
      $region13: #{tpu_custom_call.1} parent=5 // pred_check
        %p162 = pneg %p161
      $region14: #{tpu_custom_call.1} parent=5 // pred_check_branch
        %164 = sbr.rel (%p162) target = $region16
      $region15: #{tpu_custom_call.1} parent=5 // pred_region
        // Predicated region
        $region17: #{tpu_custom_call.1} parent=15 // pred_check
          %p165 = pneg %p76
        $region18: #{tpu_custom_call.1} parent=15 // pred_check_branch
          %167 = sbr.rel (%p165) target = $region20
        $region19: #{tpu_custom_call.1} parent=15 // pred_region
          %s168 = sand.u32 %s66, 1
          %s169 = scalar_lea.sflag [#allocation9], %s168
          %s170 = sand.u32 %s66, 1
          %s171 = smul.addr %s170, 8
          %s172 = scalar_lea.vmem [#allocation8], %s171
          %s173 = smul.u32 %s45, 2
          %s174 = sadd.s32 %s173, %s46
          %s175 = sld [smem:[#allocation6 + %s174]]
          %177 = vsyncadd %s169, 0
          %s178 = smul.addr %s175, 8
          %s179 = scalar_lea.hbm %s3, %s178
          %s181 = sshll.u32 %s179, 4
          %s182 = int_to_ptr.hbm [resolvable:$true] %s181
          %s183 = sshll.u32 %s172, 4
          %s184 = int_to_ptr.vmem [resolvable:$true] %s183
          %186 = dma.hbm_to_vmem [thread:$0]  %s182, 128, %s184, %s169
        $region20: #{tpu_custom_call.1} parent=15 // pred_fallthru
          _
        // Predicated region
        $region21: #{tpu_custom_call.1} parent=15 // pred_check
          %p187 = pneg %p108
        $region22: #{tpu_custom_call.1} parent=15 // pred_check_branch
          %189 = sbr.rel (%p187) target = $region24
        $region23: #{tpu_custom_call.1} parent=15 // pred_region
          %s190 = sand.u32 %s98, 1
          %s191 = scalar_lea.sflag [#allocation12], %s190
          %s192 = sand.u32 %s98, 1
          %s193 = smul.addr %s192, 8
          %s194 = scalar_lea.vmem [#allocation11], %s193
          %s195 = smul.u32 %s45, 2
          %s196 = sadd.s32 %s195, %s46
          %s197 = sld [smem:[#allocation6 + %s196]]
          %199 = vsyncadd %s191, 0
          %s200 = smul.addr %s197, 8
          %s201 = scalar_lea.hbm %s4, %s200
          %s203 = sshll.u32 %s201, 4
          %s204 = int_to_ptr.hbm [resolvable:$true] %s203
          %s205 = sshll.u32 %s194, 4
          %s206 = int_to_ptr.vmem [resolvable:$true] %s205
          %208 = dma.hbm_to_vmem [thread:$0]  %s204, 128, %s206, %s191
        $region24: #{tpu_custom_call.1} parent=15 // pred_fallthru
          _
      $region16: #{tpu_custom_call.1} parent=5 // pred_fallthru
        _
      %p209 = scmp.le.s32.totalorder 1, %s38
      %p210 = scmp.lt.s32.totalorder %s38, 3
      %p211 = pnand %p209, %p210
      %p212 = pneg %p211
      // Predicated region
      $region25: #{tpu_custom_call.1} parent=5 // pred_check
        _
      $region26: #{tpu_custom_call.1} parent=5 // pred_check_branch
        %214 = sbr.rel (%p211) target = $region28
      $region27: #{tpu_custom_call.1} parent=5 // pred_region
        %s215 = ssub.s32 %s38, 1
        %s216 = sand.u32 %s69, 1
        %s217 = scalar_lea.sflag [#allocation9], %s216
        %s218 = sand.u32 %s69, 1
        %s219 = smul.addr %s218, 8
        %s220 = scalar_lea.vmem [#allocation8], %s219
        // Predicated region
        $region29: #{tpu_custom_call.1} parent=27 // pred_check
          %p221 = pneg %p82
        $region30: #{tpu_custom_call.1} parent=27 // pred_check_branch
          %223 = sbr.rel (%p221) target = $region32
        $region31: #{tpu_custom_call.1} parent=27 // pred_region
          %225 = dma.done %s217, 128
        $region32: #{tpu_custom_call.1} parent=27 // pred_fallthru
          _
        %s226 = sand.u32 %s101, 1
        %s227 = scalar_lea.sflag [#allocation12], %s226
        %s228 = sand.u32 %s101, 1
        %s229 = smul.addr %s228, 8
        %s230 = scalar_lea.vmem [#allocation11], %s229
        // Predicated region
        $region33: #{tpu_custom_call.1} parent=27 // pred_check
          %p231 = pneg %p114
        $region34: #{tpu_custom_call.1} parent=27 // pred_check_branch
          %233 = sbr.rel (%p231) target = $region36
        $region35: #{tpu_custom_call.1} parent=27 // pred_region
          %235 = dma.done %s227, 128
        $region36: #{tpu_custom_call.1} parent=27 // pred_fallthru
          _
        %s236 = sand.u32 %s69, 1
        %s237 = scalar_lea.sflag [#allocation9], %s236
        %s238 = sand.u32 %s69, 1
        %s239 = smul.addr %s238, 8
        %s240 = scalar_lea.vmem [#allocation8], %s239
        %p241 = pneg %p82
        %p242 = pneg %p79
        %s243 = sand.u32 %s101, 1
        %s244 = scalar_lea.sflag [#allocation12], %s243
        %s245 = sand.u32 %s101, 1
        %s246 = smul.addr %s245, 8
        %s247 = scalar_lea.vmem [#allocation11], %s246
        %p248 = pneg %p114
        %p249 = pneg %p111
        %p250 = pneg %p146
        %p251 = pneg %p143
        %s252 = sand.u32 %s133, 1
        %s253 = scalar_lea.sflag [#allocation10], %s252
        %s254 = sand.u32 %s133, 1
        %s255 = smul.addr %s254, 8
        %s256 = scalar_lea.vmem [#allocation13], %s255
        %s257 = smul.u32 %s47, 2
        %s258 = sadd.s32 %s257, %s48
        %s259 = sld [smem:[#allocation6 + %s258]]
        %s260 = smul.u32 %s47, 2
        %s261 = sadd.s32 %s260, %s48
        %s262 = sld [smem:[#allocation6 + %s261]]
        %s263 = smul.u32 %s47, 2
        %s264 = sadd.s32 %s263, %s48
        %s265 = sld [smem:[#allocation5 + %s264]]
        %s267 = smul.u32 %s47, 2
        %s268 = sadd.s32 %s267, %s48
        %s269 = sld [smem:[#allocation7 + %s268]]
        %v270 = vld [vmem:[%s220] sm:$0xff]
        %v271 = vld [vmem:[%s230] sm:$0xff]
        %v272 = vrot.slane %v270, 4
        %v273 = vadd.f32 %v270, %v272
        %v274 = vrot.slane %v273, 2
        %v275 = vadd.f32 %v273, %v274
        %v276 = vrot.slane %v275, 1
        %v277 = vadd.f32 %v275, %v276
        %v278 = vmul.f32 %v277, 0.125
        %v279 = vsub.f32 %v270, %v278
        %v280 = vrot.slane %v271, 4
        %v281 = vadd.f32 %v271, %v280
        %v282 = vrot.slane %v281, 2
        %v283 = vadd.f32 %v281, %v282
        %v284 = vrot.slane %v283, 1
        %v285 = vadd.f32 %v283, %v284
        %v286 = vmul.f32 %v285, 0.125
        %v287 = vsub.f32 %v271, %v286
        %v288 = vpack.c.bf16 %v279, %v279
        %v289 = vpack.c.bf16 %v287, %v287
        %v290 = vlaneseq
        %v291 = vshrl.u32 %v290, 7
        %p292 = scmp.eq.s32.totalorder %s269, 1
        // Predicated region
        $region37: #{tpu_custom_call.1} parent=27 // pred_check
          %p293 = pneg %p292
        $region38: #{tpu_custom_call.1} parent=27 // pred_check_branch
          %295 = sbr.rel (%p293) target = $region40
        $region39: #{tpu_custom_call.1} parent=27 // pred_region
          %296 = vxpose.xlu0.b32.start [1/16] %v279, 128
          %297 = vxpose.xlu0.b32.cont [2/16] 0.0, 128
          %298 = vxpose.xlu0.b32.cont [3/16] 0.0, 128
          %299 = vxpose.xlu0.b32.cont [4/16] 0.0, 128
          %300 = vxpose.xlu0.b32.cont [5/16] 0.0, 128
          %301 = vxpose.xlu0.b32.cont [6/16] 0.0, 128
          %302 = vxpose.xlu0.b32.cont [7/16] 0.0, 128
          %303 = vxpose.xlu0.b32.cont [8/16] 0.0, 128
          %304 = vxpose.xlu0.b32.cont [9/16] 0.0, 128
          %305 = vxpose.xlu0.b32.cont [10/16] 0.0, 128
          %306 = vxpose.xlu0.b32.cont [11/16] 0.0, 128
          %307 = vxpose.xlu0.b32.cont [12/16] 0.0, 128
          %308 = vxpose.xlu0.b32.cont [13/16] 0.0, 128
          %309 = vxpose.xlu0.b32.cont [14/16] 0.0, 128
          %310 = vxpose.xlu0.b32.cont [15/16] 0.0, 128
          %311 = vxpose.xlu0.b32.end [16/16] 0.0, 128
          %v312 = vpop.trf.xlu0
          %v313 = vpop.trf.xlu0
          %v314 = vpop.trf.xlu0
          %v315 = vpop.trf.xlu0
          %v316 = vpop.trf.xlu0
          %v317 = vpop.trf.xlu0
          %v318 = vpop.trf.xlu0
          %v319 = vpop.trf.xlu0
          %v320 = vpop.trf.xlu0
          %v321 = vpop.trf.xlu0
          %v322 = vpop.trf.xlu0
          %v323 = vpop.trf.xlu0
          %v324 = vpop.trf.xlu0
          %v325 = vpop.trf.xlu0
          %v326 = vpop.trf.xlu0
          %v327 = vpop.trf.xlu0
          %v328 = vpack.c.bf16 %v312, %v312
          %v329 = vpack.c.bf16 %v313, %v313
          %v330 = vpack.c.bf16 %v314, %v314
          %v331 = vpack.c.bf16 %v315, %v315
          %v332 = vpack.c.bf16 %v316, %v316
          %v333 = vpack.c.bf16 %v317, %v317
          %v334 = vpack.c.bf16 %v318, %v318
          %v335 = vpack.c.bf16 %v319, %v319
          %v336 = vpack.c.bf16 %v320, %v320
          %v337 = vpack.c.bf16 %v321, %v321
          %v338 = vpack.c.bf16 %v322, %v322
          %v339 = vpack.c.bf16 %v323, %v323
          %v340 = vpack.c.bf16 %v324, %v324
          %v341 = vpack.c.bf16 %v325, %v325
          %v342 = vpack.c.bf16 %v326, %v326
          %v343 = vpack.c.bf16 %v327, %v327
          %vm344 = vcmask 60416
          %345 = vst.msk [vmem:[#allocation2] sm:$0xf] %vm344, %v328
          %346 = vst.msk [vmem:[#allocation2 + $0x4] sm:$0xf] %vm344, %v329
          %347 = vst.msk [vmem:[#allocation2 + $0x8] sm:$0xf] %vm344, %v330
          %348 = vst.msk [vmem:[#allocation2 + $0xc] sm:$0xf] %vm344, %v331
          %349 = vst.msk [vmem:[#allocation2 + $0x10] sm:$0xf] %vm344, %v332
          %350 = vst.msk [vmem:[#allocation2 + $0x14] sm:$0xf] %vm344, %v333
          %351 = vst.msk [vmem:[#allocation2 + $0x18] sm:$0xf] %vm344, %v334
          %352 = vst.msk [vmem:[#allocation2 + $0x1c] sm:$0xf] %vm344, %v335
          %353 = vst.msk [vmem:[#allocation2 + $0x20] sm:$0xf] %vm344, %v336
          %354 = vst.msk [vmem:[#allocation2 + $0x24] sm:$0xf] %vm344, %v337
          %355 = vst.msk [vmem:[#allocation2 + $0x28] sm:$0xf] %vm344, %v338
          %356 = vst.msk [vmem:[#allocation2 + $0x2c] sm:$0xf] %vm344, %v339
          %357 = vst.msk [vmem:[#allocation2 + $0x30] sm:$0xf] %vm344, %v340
          %358 = vst.msk [vmem:[#allocation2 + $0x34] sm:$0xf] %vm344, %v341
          %359 = vst.msk [vmem:[#allocation2 + $0x38] sm:$0xf] %vm344, %v342
          %360 = vst.msk [vmem:[#allocation2 + $0x3c] sm:$0xf] %vm344, %v343
          %361 = vxpose.xlu0.b32.start [1/16] %v287, 128
          %362 = vxpose.xlu0.b32.cont [2/16] 0.0, 128
          %363 = vxpose.xlu0.b32.cont [3/16] 0.0, 128
          %364 = vxpose.xlu0.b32.cont [4/16] 0.0, 128
          %365 = vxpose.xlu0.b32.cont [5/16] 0.0, 128
          %366 = vxpose.xlu0.b32.cont [6/16] 0.0, 128
          %367 = vxpose.xlu0.b32.cont [7/16] 0.0, 128
          %368 = vxpose.xlu0.b32.cont [8/16] 0.0, 128
          %369 = vxpose.xlu0.b32.cont [9/16] 0.0, 128
          %370 = vxpose.xlu0.b32.cont [10/16] 0.0, 128
          %371 = vxpose.xlu0.b32.cont [11/16] 0.0, 128
          %372 = vxpose.xlu0.b32.cont [12/16] 0.0, 128
          %373 = vxpose.xlu0.b32.cont [13/16] 0.0, 128
          %374 = vxpose.xlu0.b32.cont [14/16] 0.0, 128
          %375 = vxpose.xlu0.b32.cont [15/16] 0.0, 128
          %376 = vxpose.xlu0.b32.end [16/16] 0.0, 128
          %v377 = vpop.trf.xlu0
          %v378 = vpop.trf.xlu0
          %v379 = vpop.trf.xlu0
          %v380 = vpop.trf.xlu0
          %v381 = vpop.trf.xlu0
          %v382 = vpop.trf.xlu0
          %v383 = vpop.trf.xlu0
          %v384 = vpop.trf.xlu0
          %v385 = vpop.trf.xlu0
          %v386 = vpop.trf.xlu0
          %v387 = vpop.trf.xlu0
          %v388 = vpop.trf.xlu0
          %v389 = vpop.trf.xlu0
          %v390 = vpop.trf.xlu0
          %v391 = vpop.trf.xlu0
          %v392 = vpop.trf.xlu0
          %v393 = vpack.c.bf16 %v377, %v377
          %v394 = vpack.c.bf16 %v378, %v378
          %v395 = vpack.c.bf16 %v379, %v379
          %v396 = vpack.c.bf16 %v380, %v380
          %v397 = vpack.c.bf16 %v381, %v381
          %v398 = vpack.c.bf16 %v382, %v382
          %v399 = vpack.c.bf16 %v383, %v383
          %v400 = vpack.c.bf16 %v384, %v384
          %v401 = vpack.c.bf16 %v385, %v385
          %v402 = vpack.c.bf16 %v386, %v386
          %v403 = vpack.c.bf16 %v387, %v387
          %v404 = vpack.c.bf16 %v388, %v388
          %v405 = vpack.c.bf16 %v389, %v389
          %v406 = vpack.c.bf16 %v390, %v390
          %v407 = vpack.c.bf16 %v391, %v391
          %v408 = vpack.c.bf16 %v392, %v392
          %409 = vst.msk [vmem:[#allocation3] sm:$0xf] %vm344, %v393
          %410 = vst.msk [vmem:[#allocation3 + $0x4] sm:$0xf] %vm344, %v394
          %411 = vst.msk [vmem:[#allocation3 + $0x8] sm:$0xf] %vm344, %v395
          %412 = vst.msk [vmem:[#allocation3 + $0xc] sm:$0xf] %vm344, %v396
          %413 = vst.msk [vmem:[#allocation3 + $0x10] sm:$0xf] %vm344, %v397
          %414 = vst.msk [vmem:[#allocation3 + $0x14] sm:$0xf] %vm344, %v398
          %415 = vst.msk [vmem:[#allocation3 + $0x18] sm:$0xf] %vm344, %v399
          %416 = vst.msk [vmem:[#allocation3 + $0x1c] sm:$0xf] %vm344, %v400
          %417 = vst.msk [vmem:[#allocation3 + $0x20] sm:$0xf] %vm344, %v401
          %418 = vst.msk [vmem:[#allocation3 + $0x24] sm:$0xf] %vm344, %v402
          %419 = vst.msk [vmem:[#allocation3 + $0x28] sm:$0xf] %vm344, %v403
          %420 = vst.msk [vmem:[#allocation3 + $0x2c] sm:$0xf] %vm344, %v404
          %421 = vst.msk [vmem:[#allocation3 + $0x30] sm:$0xf] %vm344, %v405
          %422 = vst.msk [vmem:[#allocation3 + $0x34] sm:$0xf] %vm344, %v406
          %423 = vst.msk [vmem:[#allocation3 + $0x38] sm:$0xf] %vm344, %v407
          %424 = vst.msk [vmem:[#allocation3 + $0x3c] sm:$0xf] %vm344, %v408
          %s425 = sld [smem:[#allocation5 + %s268]]
          %v426 = vlaneseq
          %v427 = vand.u32 %v426, 127
          %s428 = smul.u32 %s425, 128
          %v429 = vstv %s428
          %v430 = vadd.s32 %v427, %v429
          %vm431 = vcmp.lt.s32.totalorder %v430, 32
          %v432 = vsel %vm431, 1, 0
          %v433 = vcvt.s32.f32 %v432
          %v434 = vsub.f32 %v270, %v271
          %v435 = vmul.f32 %v434, %v434
          %436 = vadd.xlane.f32.xlu0 %v435
          %v437 = vpop.xlane.xlu0 %436
          %v438 = vrot.slane %v437, 4
          %v439 = vadd.f32 %v437, %v438
          %v440 = vrot.slane %v439, 2
          %v441 = vadd.f32 %v439, %v440
          %v442 = vrot.slane %v441, 1
          %v443 = vadd.f32 %v441, %v442
          %s444 = vtos %v443
          %v445 = vmul.f32 %v279, %v279
          %v446 = vrot.slane %v445, 4
          %v447 = vadd.f32 %v445, %v446
          %v448 = vrot.slane %v447, 2
          %v449 = vadd.f32 %v447, %v448
          %v450 = vrot.slane %v449, 1
          %v451 = vadd.f32 %v449, %v450
          %v452 = vmul.f32 %v287, %v287
          %v453 = vrot.slane %v452, 4
          %v454 = vadd.f32 %v452, %v453
          %v455 = vrot.slane %v454, 2
          %v456 = vadd.f32 %v454, %v455
          %v457 = vrot.slane %v456, 1
          %v458 = vadd.f32 %v456, %v457
          %v459 = vmul.f32 %v451, 0.14285715
          %v460 = vadd.f32 %v459, 0.0001
          %v461 = vrsqrt.pop %v460
          %v462 = vmul.f32 %v461, %v460
          %v463 = vmul.f32 %v462, %v461
          %v464 = vmul.f32 0.5, %v463
          %v465 = vsub.f32 1.5, %v464
          %v466 = vmul.f32 %v461, %v465
          %v467 = vmul.f32 %v460, %v466
          %vm468 = vcmp.eq.f32.partialorder %v460, inf
          %v469 = vsel %vm468, %v460, %v467
          %vm470 = vcmp.eq.f32.partialorder %v460, 0.0
          %v471 = vand.u32 %v460, 2147483648
          %v472 = vsel %vm470, %v471, %v469
          %v473 = vmul.f32 %v458, 0.14285715
          %v474 = vadd.f32 %v473, 0.0001
          %v475 = vrsqrt.pop %v474
          %v476 = vmul.f32 %v475, %v474
          %v477 = vmul.f32 %v476, %v475
          %v478 = vmul.f32 0.5, %v477
          %v479 = vsub.f32 1.5, %v478
          %v480 = vmul.f32 %v475, %v479
          %v481 = vmul.f32 %v474, %v480
          %vm482 = vcmp.eq.f32.partialorder %v474, inf
          %v483 = vsel %vm482, %v474, %v481
          %vm484 = vcmp.eq.f32.partialorder %v474, 0.0
          %v485 = vand.u32 %v474, 2147483648
          %v486 = vsel %vm484, %v485, %v483
          %v487 = vsub.f32 1.0, %v472
          %v488 = vmax.f32 %v487, 0.0
          %v489 = vmul.f32 %v488, %v433
          %vm490 = vcmask 1040384
          %v491 = vsel %vm490, %v489, 0.0
          %492 = vadd.xlane.f32.xlu0 %v491
          %v493 = vpop.xlane.xlu0 %492
          %v494 = vrot.slane %v493, 4
          %v495 = vadd.f32 %v493, %v494
          %v496 = vrot.slane %v495, 2
          %v497 = vadd.f32 %v495, %v496
          %v498 = vrot.slane %v497, 1
          %v499 = vadd.f32 %v497, %v498
          %s500 = vtos %v499
          %v501 = vsub.f32 1.0, %v486
          %v502 = vmax.f32 %v501, 0.0
          %v503 = vmul.f32 %v502, %v433
          %v504 = vsel %vm490, %v503, 0.0
          %505 = vadd.xlane.f32.xlu0 %v504
          %v506 = vpop.xlane.xlu0 %505
          %v507 = vrot.slane %v506, 4
          %v508 = vadd.f32 %v506, %v507
          %v509 = vrot.slane %v508, 2
          %v510 = vadd.f32 %v508, %v509
          %v511 = vrot.slane %v510, 1
          %v512 = vadd.f32 %v510, %v511
          %s513 = vtos %v512
          %v514 = vmul.f32 %v451, %v451
          %v515 = vsel %vm490, %v514, 0.0
          %516 = vadd.xlane.f32.xlu0 %v515
          %v517 = vpop.xlane.xlu0 %516
          %v518 = vrot.slane %v517, 4
          %v519 = vadd.f32 %v517, %v518
          %v520 = vrot.slane %v519, 2
          %v521 = vadd.f32 %v519, %v520
          %v522 = vrot.slane %v521, 1
          %v523 = vadd.f32 %v521, %v522
          %s524 = vtos %v523
          %v525 = vmul.f32 %v458, %v458
          %v526 = vsel %vm490, %v525, 0.0
          %527 = vadd.xlane.f32.xlu0 %v526
          %v528 = vpop.xlane.xlu0 %527
          %v529 = vrot.slane %v528, 4
          %v530 = vadd.f32 %v528, %v529
          %v531 = vrot.slane %v530, 2
          %v532 = vadd.f32 %v530, %v531
          %v533 = vrot.slane %v532, 1
          %v534 = vadd.f32 %v532, %v533
          %s535 = vtos %v534
          %s536 = sadd.f32 %s524, %s535
          %vm537 = vcmp.eq.s32.totalorder %v291, 0
          %vm538 = vcmp.eq.s32.totalorder %v291, 1
          %vm539 = vcmp.eq.s32.totalorder %v291, 2
          %vm540 = vcmp.eq.s32.totalorder %v291, 3
          %s541 = ssub.f32 0.0, %s536
          %v542 = vstv %s541
          %v543 = vsel %vm540, %v542, 0.0
          %v544 = vstv %s513
          %v545 = vsel %vm539, %v544, %v543
          %v546 = vstv %s500
          %v547 = vsel %vm538, %v546, %v545
          %v548 = vstv %s444
          %v549 = vsel %vm537, %v548, %v547
          %550 = vst [vmem:[%s256] sm:$0xff] %v549
        $region40: #{tpu_custom_call.1} parent=27 // pred_fallthru
          _
        %s551 = scvt.s32.f32 %s269
        %v552 = vld [vmem:[#allocation2] sm:$0xf]
        %v553 = vld [vmem:[#allocation2 + $0x4] sm:$0xf]
        %v554 = vld [vmem:[#allocation2 + $0x8] sm:$0xf]
        %v555 = vld [vmem:[#allocation2 + $0xc] sm:$0xf]
        %v556 = vld [vmem:[#allocation2 + $0x10] sm:$0xf]
        %v557 = vld [vmem:[#allocation2 + $0x14] sm:$0xf]
        %v558 = vld [vmem:[#allocation2 + $0x18] sm:$0xf]
        %v559 = vld [vmem:[#allocation2 + $0x1c] sm:$0xf]
        %v560 = vld [vmem:[#allocation2 + $0x20] sm:$0xf]
        %v561 = vld [vmem:[#allocation2 + $0x24] sm:$0xf]
        %v562 = vld [vmem:[#allocation2 + $0x28] sm:$0xf]
        %v563 = vld [vmem:[#allocation2 + $0x2c] sm:$0xf]
        %v564 = vld [vmem:[#allocation2 + $0x30] sm:$0xf]
        %v565 = vld [vmem:[#allocation2 + $0x34] sm:$0xf]
        %v566 = vld [vmem:[#allocation2 + $0x38] sm:$0xf]
        %v567 = vld [vmem:[#allocation2 + $0x3c] sm:$0xf]
        %v584 = vunpack.c.l.b16 %v552
        %v585 = vunpack.c.l.b16 %v553
        %v586 = vunpack.c.l.b16 %v554
        %v587 = vunpack.c.l.b16 %v555
        %v588 = vunpack.c.l.b16 %v556
        %v589 = vunpack.c.l.b16 %v557
        %v590 = vunpack.c.l.b16 %v558
        %v591 = vunpack.c.l.b16 %v559
        %v592 = vunpack.c.l.b16 %v560
        %v593 = vunpack.c.l.b16 %v561
        %v594 = vunpack.c.l.b16 %v562
        %v595 = vunpack.c.l.b16 %v563
        %v596 = vunpack.c.l.b16 %v564
        %v597 = vunpack.c.l.b16 %v565
        %v598 = vunpack.c.l.b16 %v566
        %v599 = vunpack.c.l.b16 %v567
        %v600 = vpack.c.b16 %v585, %v584
        %v601 = vpack.c.b16 %v587, %v586
        %v602 = vpack.c.b16 %v589, %v588
        %v603 = vpack.c.b16 %v591, %v590
        %v604 = vpack.c.b16 %v593, %v592
        %v605 = vpack.c.b16 %v595, %v594
        %v606 = vpack.c.b16 %v597, %v596
        %v607 = vpack.c.b16 %v599, %v598
        %vm608 = vcmask 64512
        %v610 = vsel %vm608, %v600, 0
        %v613 = vsel %vm608, %v601, 0
        %v616 = vsel %vm608, %v602, 0
        %v619 = vsel %vm608, %v603, 0
        %v622 = vsel %vm608, %v604, 0
        %v625 = vsel %vm608, %v605, 0
        %v628 = vsel %vm608, %v606, 0
        %v631 = vsel %vm608, %v607, 0
        %vm633 = vcmask 1043456
        %v635 = vsel %vm633, %v288, 0
        %637 = vmatpush.bf16.msra.mxu0 0
        %638 = vmatpush.bf16.msra.mxu0 0
        %639 = vmatpush.bf16.msra.mxu0 0
        %640 = vmatpush.bf16.msra.mxu0 0
        %641 = vmatpush.bf16.msra.mxu0 0
        %642 = vmatpush.bf16.msra.mxu0 0
        %643 = vmatpush.bf16.msra.mxu0 0
        %644 = vmatpush.bf16.msra.mxu0 %v635
        %645 = vmatmul.bf16.gmra.mxu0 %v610
        %v646 = vpop.f32.mrf.mxu0
        %v647 = vadd.f32 0.0, %v646
        %v648 = vpop.f32.mrf.mxu0
        %v649 = vadd.f32 0.0, %v648
        %650 = vmatmul.bf16.gmra.mxu0 %v613
        %v651 = vpop.f32.mrf.mxu0
        %v652 = vadd.f32 0.0, %v651
        %v653 = vpop.f32.mrf.mxu0
        %v654 = vadd.f32 0.0, %v653
        %655 = vmatmul.bf16.gmra.mxu0 %v616
        %v656 = vpop.f32.mrf.mxu0
        %v657 = vadd.f32 0.0, %v656
        %v658 = vpop.f32.mrf.mxu0
        %v659 = vadd.f32 0.0, %v658
        %660 = vmatmul.bf16.gmra.mxu0 %v619
        %v661 = vpop.f32.mrf.mxu0
        %v662 = vadd.f32 0.0, %v661
        %v663 = vpop.f32.mrf.mxu0
        %v664 = vadd.f32 0.0, %v663
        %665 = vmatmul.bf16.gmra.mxu0 %v622
        %v666 = vpop.f32.mrf.mxu0
        %v667 = vadd.f32 0.0, %v666
        %v668 = vpop.f32.mrf.mxu0
        %v669 = vadd.f32 0.0, %v668
        %670 = vmatmul.bf16.gmra.mxu0 %v625
        %v671 = vpop.f32.mrf.mxu0
        %v672 = vadd.f32 0.0, %v671
        %v673 = vpop.f32.mrf.mxu0
        %v674 = vadd.f32 0.0, %v673
        %675 = vmatmul.bf16.gmra.mxu0 %v628
        %v676 = vpop.f32.mrf.mxu0
        %v677 = vadd.f32 0.0, %v676
        %v678 = vpop.f32.mrf.mxu0
        %v679 = vadd.f32 0.0, %v678
        %680 = vmatmul.bf16.gmra.mxu0 %v631
        %v681 = vpop.f32.mrf.mxu0
        %v682 = vadd.f32 0.0, %v681
        %v683 = vpop.f32.mrf.mxu0
        %v684 = vadd.f32 0.0, %v683
        %685 = vdwg.mxu0
        %v686 = vmul.f32 %v647, %v647
        %v687 = vmul.f32 %v649, %v649
        %v688 = vmul.f32 %v652, %v652
        %v689 = vmul.f32 %v654, %v654
        %v690 = vmul.f32 %v657, %v657
        %v691 = vmul.f32 %v659, %v659
        %v692 = vmul.f32 %v662, %v662
        %v693 = vmul.f32 %v664, %v664
        %v694 = vmul.f32 %v667, %v667
        %v695 = vmul.f32 %v669, %v669
        %v696 = vmul.f32 %v672, %v672
        %v697 = vmul.f32 %v674, %v674
        %v698 = vmul.f32 %v677, %v677
        %v699 = vmul.f32 %v679, %v679
        %v700 = vmul.f32 %v682, %v682
        %v701 = vmul.f32 %v684, %v684
        %v702 = vadd.f32 %v686, %v687
        %v703 = vadd.f32 %v702, %v688
        %v704 = vadd.f32 %v703, %v689
        %v705 = vadd.f32 %v704, %v690
        %v706 = vadd.f32 %v705, %v691
        %v707 = vadd.f32 %v706, %v692
        %v708 = vadd.f32 %v707, %v693
        %v709 = vadd.f32 %v708, %v694
        %v710 = vadd.f32 %v709, %v695
        %v711 = vadd.f32 %v710, %v696
        %v712 = vadd.f32 %v711, %v697
        %v713 = vadd.f32 %v712, %v698
        %v714 = vadd.f32 %v713, %v699
        %v715 = vadd.f32 %v714, %v700
        %v716 = vadd.f32 %v715, %v701
        %717 = vadd.xlane.f32.xlu0 %v716
        %v718 = vpop.xlane.xlu0 %717
        %v719 = vrot.slane %v718, 4
        %v720 = vadd.f32 %v718, %v719
        %v721 = vrot.slane %v720, 2
        %v722 = vadd.f32 %v720, %v721
        %v723 = vrot.slane %v722, 1
        %v724 = vadd.f32 %v722, %v723
        %s725 = vtos %v724
        %v726 = vld [vmem:[#allocation3] sm:$0xf]
        %v727 = vld [vmem:[#allocation3 + $0x4] sm:$0xf]
        %v728 = vld [vmem:[#allocation3 + $0x8] sm:$0xf]
        %v729 = vld [vmem:[#allocation3 + $0xc] sm:$0xf]
        %v730 = vld [vmem:[#allocation3 + $0x10] sm:$0xf]
        %v731 = vld [vmem:[#allocation3 + $0x14] sm:$0xf]
        %v732 = vld [vmem:[#allocation3 + $0x18] sm:$0xf]
        %v733 = vld [vmem:[#allocation3 + $0x1c] sm:$0xf]
        %v734 = vld [vmem:[#allocation3 + $0x20] sm:$0xf]
        %v735 = vld [vmem:[#allocation3 + $0x24] sm:$0xf]
        %v736 = vld [vmem:[#allocation3 + $0x28] sm:$0xf]
        %v737 = vld [vmem:[#allocation3 + $0x2c] sm:$0xf]
        %v738 = vld [vmem:[#allocation3 + $0x30] sm:$0xf]
        %v739 = vld [vmem:[#allocation3 + $0x34] sm:$0xf]
        %v740 = vld [vmem:[#allocation3 + $0x38] sm:$0xf]
        %v741 = vld [vmem:[#allocation3 + $0x3c] sm:$0xf]
        %v758 = vunpack.c.l.b16 %v726
        %v759 = vunpack.c.l.b16 %v727
        %v760 = vunpack.c.l.b16 %v728
        %v761 = vunpack.c.l.b16 %v729
        %v762 = vunpack.c.l.b16 %v730
        %v763 = vunpack.c.l.b16 %v731
        %v764 = vunpack.c.l.b16 %v732
        %v765 = vunpack.c.l.b16 %v733
        %v766 = vunpack.c.l.b16 %v734
        %v767 = vunpack.c.l.b16 %v735
        %v768 = vunpack.c.l.b16 %v736
        %v769 = vunpack.c.l.b16 %v737
        %v770 = vunpack.c.l.b16 %v738
        %v771 = vunpack.c.l.b16 %v739
        %v772 = vunpack.c.l.b16 %v740
        %v773 = vunpack.c.l.b16 %v741
        %v774 = vpack.c.b16 %v759, %v758
        %v775 = vpack.c.b16 %v761, %v760
        %v776 = vpack.c.b16 %v763, %v762
        %v777 = vpack.c.b16 %v765, %v764
        %v778 = vpack.c.b16 %v767, %v766
        %v779 = vpack.c.b16 %v769, %v768
        %v780 = vpack.c.b16 %v771, %v770
        %v781 = vpack.c.b16 %v773, %v772
        %v783 = vsel %vm608, %v774, 0
        %v786 = vsel %vm608, %v775, 0
        %v789 = vsel %vm608, %v776, 0
        %v792 = vsel %vm608, %v777, 0
        %v795 = vsel %vm608, %v778, 0
        %v798 = vsel %vm608, %v779, 0
        %v801 = vsel %vm608, %v780, 0
        %v804 = vsel %vm608, %v781, 0
        %v807 = vsel %vm633, %v289, 0
        %809 = vmatpush.bf16.msra.mxu0 0
        %810 = vmatpush.bf16.msra.mxu0 0
        %811 = vmatpush.bf16.msra.mxu0 0
        %812 = vmatpush.bf16.msra.mxu0 0
        %813 = vmatpush.bf16.msra.mxu0 0
        %814 = vmatpush.bf16.msra.mxu0 0
        %815 = vmatpush.bf16.msra.mxu0 0
        %816 = vmatpush.bf16.msra.mxu0 %v807
        %817 = vmatmul.bf16.gmra.mxu0 %v783
        %v818 = vpop.f32.mrf.mxu0
        %v819 = vadd.f32 0.0, %v818
        %v820 = vpop.f32.mrf.mxu0
        %v821 = vadd.f32 0.0, %v820
        %822 = vmatmul.bf16.gmra.mxu0 %v786
        %v823 = vpop.f32.mrf.mxu0
        %v824 = vadd.f32 0.0, %v823
        %v825 = vpop.f32.mrf.mxu0
        %v826 = vadd.f32 0.0, %v825
        %827 = vmatmul.bf16.gmra.mxu0 %v789
        %v828 = vpop.f32.mrf.mxu0
        %v829 = vadd.f32 0.0, %v828
        %v830 = vpop.f32.mrf.mxu0
        %v831 = vadd.f32 0.0, %v830
        %832 = vmatmul.bf16.gmra.mxu0 %v792
        %v833 = vpop.f32.mrf.mxu0
        %v834 = vadd.f32 0.0, %v833
        %v835 = vpop.f32.mrf.mxu0
        %v836 = vadd.f32 0.0, %v835
        %837 = vmatmul.bf16.gmra.mxu0 %v795
        %v838 = vpop.f32.mrf.mxu0
        %v839 = vadd.f32 0.0, %v838
        %v840 = vpop.f32.mrf.mxu0
        %v841 = vadd.f32 0.0, %v840
        %842 = vmatmul.bf16.gmra.mxu0 %v798
        %v843 = vpop.f32.mrf.mxu0
        %v844 = vadd.f32 0.0, %v843
        %v845 = vpop.f32.mrf.mxu0
        %v846 = vadd.f32 0.0, %v845
        %847 = vmatmul.bf16.gmra.mxu0 %v801
        %v848 = vpop.f32.mrf.mxu0
        %v849 = vadd.f32 0.0, %v848
        %v850 = vpop.f32.mrf.mxu0
        %v851 = vadd.f32 0.0, %v850
        %852 = vmatmul.bf16.gmra.mxu0 %v804
        %v853 = vpop.f32.mrf.mxu0
        %v854 = vadd.f32 0.0, %v853
        %v855 = vpop.f32.mrf.mxu0
        %v856 = vadd.f32 0.0, %v855
        %857 = vdwg.mxu0
        %v858 = vmul.f32 %v819, %v819
        %v859 = vmul.f32 %v821, %v821
        %v860 = vmul.f32 %v824, %v824
        %v861 = vmul.f32 %v826, %v826
        %v862 = vmul.f32 %v829, %v829
        %v863 = vmul.f32 %v831, %v831
        %v864 = vmul.f32 %v834, %v834
        %v865 = vmul.f32 %v836, %v836
        %v866 = vmul.f32 %v839, %v839
        %v867 = vmul.f32 %v841, %v841
        %v868 = vmul.f32 %v844, %v844
        %v869 = vmul.f32 %v846, %v846
        %v870 = vmul.f32 %v849, %v849
        %v871 = vmul.f32 %v851, %v851
        %v872 = vmul.f32 %v854, %v854
        %v873 = vmul.f32 %v856, %v856
        %v874 = vadd.f32 %v858, %v859
        %v875 = vadd.f32 %v874, %v860
        %v876 = vadd.f32 %v875, %v861
        %v877 = vadd.f32 %v876, %v862
        %v878 = vadd.f32 %v877, %v863
        %v879 = vadd.f32 %v878, %v864
        %v880 = vadd.f32 %v879, %v865
        %v881 = vadd.f32 %v880, %v866
        %v882 = vadd.f32 %v881, %v867
        %v883 = vadd.f32 %v882, %v868
        %v884 = vadd.f32 %v883, %v869
        %v885 = vadd.f32 %v884, %v870
        %v886 = vadd.f32 %v885, %v871
        %v887 = vadd.f32 %v886, %v872
        %v888 = vadd.f32 %v887, %v873
        %889 = vadd.xlane.f32.xlu0 %v888
        %v890 = vpop.xlane.xlu0 %889
        %v891 = vrot.slane %v890, 4
        %v892 = vadd.f32 %v890, %v891
        %v893 = vrot.slane %v892, 2
        %v894 = vadd.f32 %v892, %v893
        %v895 = vrot.slane %v894, 1
        %v896 = vadd.f32 %v894, %v895
        %s897 = vtos %v896
        %s898 = sadd.f32 %s725, %s897
        %v899 = vld [vmem:[%s256] sm:$0xff]
        %vm900 = vcmp.eq.s32.totalorder %v291, 3
        %s901 = smul.f32 %s551, %s898
        %v902 = vstv %s901
        %v903 = vsel %vm900, %v902, 0.0
        %v904 = vadd.f32 %v899, %v903
        %905 = vst [vmem:[%s256] sm:$0xff] %v904
        %s906 = sand.u32 %s133, 1
        %s907 = scalar_lea.sflag [#allocation10], %s906
        %s908 = sand.u32 %s133, 1
        %s909 = smul.addr %s908, 8
        %s910 = scalar_lea.vmem [#allocation13], %s909
        // Predicated region
        $region41: #{tpu_custom_call.1} parent=27 // pred_check
          %p911 = pneg %p143
        $region42: #{tpu_custom_call.1} parent=27 // pred_check_branch
          %913 = sbr.rel (%p911) target = $region44
        $region43: #{tpu_custom_call.1} parent=27 // pred_region
          %s914 = smul.u32 %s47, 2
          %s915 = sadd.s32 %s914, %s48
          %s916 = sld [smem:[#allocation5 + %s915]]
          %918 = vsyncadd %s907, 0
          %s919 = smul.addr %s916, 8
          %s920 = scalar_lea.hbm %s5, %s919
          %s922 = sshll.u32 %s910, 4
          %s923 = int_to_ptr.vmem [resolvable:$true] %s922
          %s924 = sshll.u32 %s920, 4
          %s925 = int_to_ptr.hbm [resolvable:$true] %s924
          %927 = dma.vmem_to_hbm [thread:$0]  %s923, 128, %s925, %s907
        $region44: #{tpu_custom_call.1} parent=27 // pred_fallthru
          _
      $region28: #{tpu_custom_call.1} parent=5 // pred_fallthru
        _
      %p928 = scmp.le.s32.totalorder 2, %s38
      // Predicated region
      $region45: #{tpu_custom_call.1} parent=5 // pred_check
        %p929 = pneg %p928
      $region46: #{tpu_custom_call.1} parent=5 // pred_check_branch
        %931 = sbr.rel (%p929) target = $region48
      $region47: #{tpu_custom_call.1} parent=5 // pred_region
        %s932 = ssub.s32 %s38, 2
        // Predicated region
        $region49: #{tpu_custom_call.1} parent=47 // pred_check
          %p933 = pneg %p149
        $region50: #{tpu_custom_call.1} parent=47 // pred_check_branch
          %935 = sbr.rel (%p933) target = $region52
        $region51: #{tpu_custom_call.1} parent=47 // pred_region
          %s936 = sand.u32 %s134, 1
          %s937 = scalar_lea.sflag [#allocation10], %s936
          %s938 = sand.u32 %s134, 1
          %s939 = smul.addr %s938, 8
          %s940 = scalar_lea.vmem [#allocation13], %s939
          %942 = dma.done %s937, 128
        $region52: #{tpu_custom_call.1} parent=47 // pred_fallthru
          _
      $region48: #{tpu_custom_call.1} parent=5 // pred_fallthru
        _
    $region6: #{tpu_custom_call.1} parent=1 // loop_footer
      %s42 = sadd.s32 1, %s38
    $region7: #{tpu_custom_call.1} parent=1 // loop_footer_branch
      %37 = sbr.rel target = $region3
    $region8: #{tpu_custom_call.1} parent=1 // loop_exit
      _
    %943 = vsyncpa [#allocation9], 1
    %s944 = scalar_lea.sflag [#allocation9], 1
    %945 = vsyncpa %s944, 1
    %946 = vsyncpa [#allocation12], 1
    %s947 = scalar_lea.sflag [#allocation12], 1
    %948 = vsyncpa %s947, 1
    %949 = vsyncpa [#allocation10], 1
    %s950 = scalar_lea.sflag [#allocation10], 1
    %951 = vsyncpa %s950, 1

</llo_original>
